<compile_context>
chip_gen: v7x
topology: tpu7x:2x2x1
jax: 0.10.0
libtpu: 0.0.40
codegen_flags: <defaults>
</compile_context>

<pallas_src>
import jax
import jax.numpy as jnp
from jax.experimental import pallas as pl
from jax.experimental.pallas import tpu as pltpu

_GROUP = 8  # tokens packed per 128-wide output row (lane width = _GROUP * n_tags)


def _round_up(x, m):
    return ((x + m - 1) // m) * m


def _embed_kernel(idx_ref, expand_ref, tag_row_ref, w_hi_ref, w_mid_ref, w_lo_ref,
                  out_ref):
    # idx_ref:     (R, G)   int32  raw tag ids, G tokens per output row
    # expand_ref:  (G, L)   bf16   expand[g, c] = 1.0 iff c // n_tags == g
    # tag_row_ref: (1, L)   f32    tag_row[0, c] = float(c % n_tags)
    # w_hi/mid/lo: (L, L)   bf16   non-overlapping planes of the block-diag weight
    # out_ref:     (R, L)   f32
    idx_bf = idx_ref[...].astype(jnp.bfloat16)  # exact: ids < 256
    # Lane-expand the G per-row ids across their n_tags-wide lane slots with one
    # small bf16 MXU pass (exact: expand has a single 1.0 per column, rest zeros).
    idx_rep = jnp.dot(idx_bf, expand_ref[...], preferred_element_type=jnp.float32)
    # One-hot over lanes: lane c is hot iff the token in its group carries tag c%n_tags.
    onehot = (idx_rep == tag_row_ref[...]).astype(jnp.bfloat16)  # exact 0/1
    # Bit-exact gather: the one-hot row selects exactly one row of each bf16 plane;
    # the planes were constructed so ((hi + mid) + lo) reconstructs the f32 weight
    # exactly under this left-to-right f32 accumulation order.
    acc = jnp.dot(onehot, w_hi_ref[...], preferred_element_type=jnp.float32)
    acc = acc + jnp.dot(onehot, w_mid_ref[...], preferred_element_type=jnp.float32)
    acc = acc + jnp.dot(onehot, w_lo_ref[...], preferred_element_type=jnp.float32)
    out_ref[...] = acc.astype(out_ref.dtype)


def precompute_tables(layer_matrix, group=_GROUP):
    """Per-weight constants. Build once per layer_matrix and reuse (hoisted out of
    the per-call path, per perf review)."""
    n_tags = layer_matrix.shape[0]
    lanes = group * n_tags
    w = layer_matrix.astype(jnp.float32)
    w_bd = jnp.kron(jnp.eye(group, dtype=jnp.float32), w)  # (lanes, lanes) block-diag
    # Split the f32 weight into 3 non-overlapping bf16 planes such that
    # (hi + mid) + lo == w_bd bit-exactly in f32 under the kernel's add order.
    w_hi = w_bd.astype(jnp.bfloat16)
    w_mid = (w_bd - w_hi.astype(jnp.float32)).astype(jnp.bfloat16)
    partial = w_hi.astype(jnp.float32) + w_mid.astype(jnp.float32)
    w_lo = (w_bd - partial).astype(jnp.bfloat16)  # residual has <8 sig bits -> exact
    c = jnp.arange(lanes, dtype=jnp.int32)
    expand = (c[None, :] // n_tags
              == jnp.arange(group, dtype=jnp.int32)[:, None]).astype(jnp.bfloat16)
    tag_row = (c % n_tags).astype(jnp.float32)[None, :]  # (1, lanes)
    return expand, tag_row, w_hi, w_mid, w_lo


def pos_embedding_forward(
    idx,
    layer_matrix,
    *,
    tables=None,
    token_tile=32768,         # tokens per grid step cap -> R_max = 4096 output rows
    min_grid_steps=4,         # >= 2 grid steps per TensorCore on v7x
    min_pallas_tokens=4096,   # below this, XLA's native gather wins (launch overhead)
    force_pallas=False,
):
    """idx: (B, S) int; layer_matrix: (n_tags, n_tags) float32.

    Returns (B, S, n_tags) float32 with out[b, s] = layer_matrix[idx[b, s]].
    """
    B, S = idx.shape
    n_tags = layer_matrix.shape[0]
    N = B * S

    if N < min_pallas_tokens and not force_pallas:
        # Tiny op: let XLA do the gather; pallas_call setup would dominate.
        return jnp.take(layer_matrix, idx.reshape(-1).astype(jnp.int32), axis=0
                        ).reshape(B, S, n_tags)

    G = _GROUP
    lanes = G * n_tags  # 128 for n_tags=16 -> lane-dense output blocks

    if tables is None:
        tables = precompute_tables(layer_matrix, G)
    expand, tag_row, w_hi, w_mid, w_lo = tables

    # ---- Block sizing: big blocks (amortize ~0.35 us/step overhead), but keep
    # >= min_grid_steps steps for v7x megacore + pipelining, cap R at 4096 rows,
    # and derive R from cdiv(rows, n_steps) to minimize tail padding. ----
    rows = pl.cdiv(N, G)
    r_max = max(8, (min(token_tile // G, 4096) // 8) * 8)
    n_steps = max(min_grid_steps, pl.cdiv(rows, r_max))
    R = _round_up(pl.cdiv(rows, n_steps), 8)
    rows_pad = _round_up(rows, R)
    n_pad_tok = rows_pad * G

    # Flatten, narrow to int32, pad with tag 0 only if needed (padded rows are
    # sliced off below).  Index prep (group offsets) now happens inside the kernel.
    idx_flat = idx.reshape(-1).astype(jnp.int32)
    if n_pad_tok != N:
        idx_flat = jnp.pad(idx_flat, (0, n_pad_tok - N))
    idx2d = idx_flat.reshape(rows_pad, G)

    grid = (rows_pad // R,)
    out = pl.pallas_call(
        _embed_kernel,
        out_shape=jax.ShapeDtypeStruct((rows_pad, lanes), jnp.float32),
        grid_spec=pltpu.PrefetchScalarGridSpec(
            num_scalar_prefetch=0,
            grid=grid,
            in_specs=[
                pl.BlockSpec((R, G), lambda i: (i, 0)),          # raw indices
                pl.BlockSpec((G, lanes), lambda i: (0, 0)),      # expansion matrix (resident)
                pl.BlockSpec((1, lanes), lambda i: (0, 0)),      # lane-tag row (resident)
                pl.BlockSpec((lanes, lanes), lambda i: (0, 0)),  # weight plane hi (resident)
                pl.BlockSpec((lanes, lanes), lambda i: (0, 0)),  # weight plane mid (resident)
                pl.BlockSpec((lanes, lanes), lambda i: (0, 0)),  # weight plane lo (resident)
            ],
            out_specs=pl.BlockSpec((R, lanes), lambda i: (i, 0)),
        ),
        compiler_params=pltpu.CompilerParams(
            dimension_semantics=("parallel",),  # shard grid steps across v7x's 2 TCs
        ),
    )(idx2d, expand, tag_row, w_hi, w_mid, w_lo)

    # (rows_pad, G*n_tags) row-major is exactly (n_pad_tok, n_tags).
    if n_pad_tok == N:
        out_flat = out.reshape(N, n_tags)          # no padding -> no slice copy
    else:
        out_flat = out.reshape(n_pad_tok, n_tags)[:N]
    return out_flat.reshape(B, S, n_tags)


def make_pos_embedding(layer_matrix, **kwargs):
    """Factory: precompute per-weight tables once and return a jitted forward fn."""
    tables = precompute_tables(layer_matrix)

    @jax.jit
    def forward(idx):
        return pos_embedding_forward(idx, layer_matrix, tables=tables, **kwargs)

    return forward


def make_orthogonal_matrix(key, n):
    """Deterministic orthogonal init (mirrors torch.nn.init.orthogonal_)."""
    a = jax.random.normal(key, (n, n), dtype=jnp.float32)
    q, r = jnp.linalg.qr(a)
    sign = jnp.sign(jnp.diag(r))
    sign = jnp.where(sign == 0, 1.0, sign)  # guard against zero diagonal
    return (q * sign[None, :]).astype(jnp.float32)


if __name__ == "__main__":
    key = jax.random.PRNGKey(0)
    k_w, k_small, k_big = jax.random.split(key, 3)

    n_tags = 16
    layer_matrix = make_orthogonal_matrix(k_w, n_tags)  # (n_tags, n_tags)

    # 1) Module-spec small shape (B=2, S=8), forced through the Pallas kernel
    #    (exercises padding + the exact 3-plane gather).
    B, S = 2, 8
    idx_small = jax.random.randint(k_small, (B, S), 0, n_tags, jnp.int32)
    out_small = jax.block_until_ready(
        pos_embedding_forward(idx_small, layer_matrix, force_pallas=True))
    ref_small = layer_matrix[idx_small]
    assert out_small.shape == (B, S, n_tags) and out_small.dtype == jnp.float32
    assert jnp.array_equal(out_small, ref_small)

    # 2) Same small shape through the dispatcher (native-gather fast path).
    out_small2 = jax.block_until_ready(pos_embedding_forward(idx_small, layer_matrix))
    assert jnp.array_equal(out_small2, ref_small)

    # 3) Realistic size through the cached/jitted factory: Pallas path, 4 parallel
    #    grid steps of R=256 rows (review-recommended clamp for N=8192 on v7x).
    forward = make_pos_embedding(layer_matrix)
    Bb, Sb = 8, 1024  # N = 8192 tokens
    idx_big = jax.random.randint(k_big, (Bb, Sb), 0, n_tags, jnp.int32)
    out_big = jax.block_until_ready(forward(idx_big))
    ref_big = layer_matrix[idx_big]
    assert out_big.shape == (Bb, Sb, n_tags) and out_big.dtype == jnp.float32
    assert jnp.array_equal(out_big, ref_big)

    print("KERNEL_OK")
</pallas_src>

<mosaic_0001>
module attributes {stable_mosaic.version = 11 : i64} {
  func.func @_embed_kernel(%arg0: i32, %arg1: memref<8x8xi32, #tpu.memory_space<vmem>>, %arg2: memref<8x128xbf16, #tpu.memory_space<vmem>>, %arg3: memref<1x128xf32, #tpu.memory_space<vmem>>, %arg4: memref<128x128xbf16, #tpu.memory_space<vmem>>, %arg5: memref<128x128xbf16, #tpu.memory_space<vmem>>, %arg6: memref<128x128xbf16, #tpu.memory_space<vmem>>, %arg7: memref<8x128xf32, #tpu.memory_space<vmem>>) attributes {dimension_semantics = [#tpu.dimension_semantics<parallel>], iteration_bounds = array<i64: 1>, scalar_prefetch = 0 : i64, scratch_operands = 0 : i64, tpu.core_type = #tpu.core_type<tc>, window_params = [{transform_indices = @transform_0, window_bounds = array<i64: 8, 8>}, {pipeline_mode = #tpu.pipeline_mode<synchronous>, transform_indices = @transform_1, window_bounds = array<i64: 8, 128>}, {pipeline_mode = #tpu.pipeline_mode<synchronous>, transform_indices = @transform_2, window_bounds = array<i64: 1, 128>}, {pipeline_mode = #tpu.pipeline_mode<synchronous>, transform_indices = @transform_3, window_bounds = array<i64: 128, 128>}, {pipeline_mode = #tpu.pipeline_mode<synchronous>, transform_indices = @transform_4, window_bounds = array<i64: 128, 128>}, {pipeline_mode = #tpu.pipeline_mode<synchronous>, transform_indices = @transform_5, window_bounds = array<i64: 128, 128>}, {transform_indices = @transform_6, window_bounds = array<i64: 8, 128>}]} {
    %c0 = arith.constant 0 : index
    %c0_0 = arith.constant 0 : index
    %0 = vector.load %arg1[%c0, %c0_0] : memref<8x8xi32, #tpu.memory_space<vmem>>, vector<8x8xi32>
    %1 = arith.sitofp %0 : vector<8x8xi32> to vector<8x8xbf16>
    %c0_1 = arith.constant 0 : index
    %c0_2 = arith.constant 0 : index
    %2 = vector.load %arg2[%c0_1, %c0_2] : memref<8x128xbf16, #tpu.memory_space<vmem>>, vector<8x128xbf16>
    %cst = arith.constant dense<0.000000e+00> : vector<8x128xf32>
    %3 = tpu.matmul %1, %2, %cst {dimension_numbers = #tpu.dot_dimension_numbers<[1], [0], [0], [1], [0, 0, 1, 1], [], []>} : vector<8x8xbf16>, vector<8x128xbf16>, vector<8x128xf32> -> vector<8x128xf32>
    %c0_3 = arith.constant 0 : index
    %c0_4 = arith.constant 0 : index
    %4 = vector.load %arg3[%c0_3, %c0_4] : memref<1x128xf32, #tpu.memory_space<vmem>>, vector<1x128xf32>
    %5 = vector.broadcast %4 : vector<1x128xf32> to vector<8x128xf32>
    %6 = arith.cmpf oeq, %3, %5 : vector<8x128xf32>
    %7 = arith.extui %6 : vector<8x128xi1> to vector<8x128xi32>
    %8 = arith.sitofp %7 : vector<8x128xi32> to vector<8x128xf32>
    %9 = arith.truncf %8 : vector<8x128xf32> to vector<8x128xbf16>
    %c0_5 = arith.constant 0 : index
    %c0_6 = arith.constant 0 : index
    %10 = vector.load %arg4[%c0_5, %c0_6] : memref<128x128xbf16, #tpu.memory_space<vmem>>, vector<128x128xbf16>
    %cst_7 = arith.constant dense<0.000000e+00> : vector<8x128xf32>
    %11 = tpu.matmul %9, %10, %cst_7 {dimension_numbers = #tpu.dot_dimension_numbers<[1], [0], [0], [1], [0, 0, 1, 1], [], []>} : vector<8x128xbf16>, vector<128x128xbf16>, vector<8x128xf32> -> vector<8x128xf32>
    %c0_8 = arith.constant 0 : index
    %c0_9 = arith.constant 0 : index
    %12 = vector.load %arg5[%c0_8, %c0_9] : memref<128x128xbf16, #tpu.memory_space<vmem>>, vector<128x128xbf16>
    %cst_10 = arith.constant dense<0.000000e+00> : vector<8x128xf32>
    %13 = tpu.matmul %9, %12, %cst_10 {dimension_numbers = #tpu.dot_dimension_numbers<[1], [0], [0], [1], [0, 0, 1, 1], [], []>} : vector<8x128xbf16>, vector<128x128xbf16>, vector<8x128xf32> -> vector<8x128xf32>
    %14 = arith.addf %11, %13 : vector<8x128xf32>
    %c0_11 = arith.constant 0 : index
    %c0_12 = arith.constant 0 : index
    %15 = vector.load %arg6[%c0_11, %c0_12] : memref<128x128xbf16, #tpu.memory_space<vmem>>, vector<128x128xbf16>
    %cst_13 = arith.constant dense<0.000000e+00> : vector<8x128xf32>
    %16 = tpu.matmul %9, %15, %cst_13 {dimension_numbers = #tpu.dot_dimension_numbers<[1], [0], [0], [1], [0, 0, 1, 1], [], []>} : vector<8x128xbf16>, vector<128x128xbf16>, vector<8x128xf32> -> vector<8x128xf32>
    %17 = arith.addf %14, %16 : vector<8x128xf32>
    %c0_14 = arith.constant 0 : index
    %c0_15 = arith.constant 0 : index
    %18 = vector.load %arg7[%c0_14, %c0_15] : memref<8x128xf32, #tpu.memory_space<vmem>>, vector<8x128xf32>
    tpu.vector_store %arg7[%c0_14, %c0_15], %17 {strides = array<i32>} : memref<8x128xf32, #tpu.memory_space<vmem>>, vector<8x128xf32>,
    return
  }
  func.func @transform_0(%arg0: i32) -> (i32, i32) {
    %c0_i32 = arith.constant 0 : i32
    %c0_i32_0 = arith.constant 0 : i32
    return %arg0, %c0_i32 : i32, i32
  }
  func.func @transform_1(%arg0: i32) -> (i32, i32) {
    %c0_i32 = arith.constant 0 : i32
    %c0_i32_0 = arith.constant 0 : i32
    %c0_i32_1 = arith.constant 0 : i32
    return %c0_i32, %c0_i32_0 : i32, i32
  }
  func.func @transform_2(%arg0: i32) -> (i32, i32) {
    %c0_i32 = arith.constant 0 : i32
    %c0_i32_0 = arith.constant 0 : i32
    %c0_i32_1 = arith.constant 0 : i32
    return %c0_i32, %c0_i32_0 : i32, i32
  }
  func.func @transform_3(%arg0: i32) -> (i32, i32) {
    %c0_i32 = arith.constant 0 : i32
    %c0_i32_0 = arith.constant 0 : i32
    %c0_i32_1 = arith.constant 0 : i32
    return %c0_i32, %c0_i32_0 : i32, i32
  }
  func.func @transform_4(%arg0: i32) -> (i32, i32) {
    %c0_i32 = arith.constant 0 : i32
    %c0_i32_0 = arith.constant 0 : i32
    %c0_i32_1 = arith.constant 0 : i32
    return %c0_i32, %c0_i32_0 : i32, i32
  }
  func.func @transform_5(%arg0: i32) -> (i32, i32) {
    %c0_i32 = arith.constant 0 : i32
    %c0_i32_0 = arith.constant 0 : i32
    %c0_i32_1 = arith.constant 0 : i32
    return %c0_i32, %c0_i32_0 : i32, i32
  }
  func.func @transform_6(%arg0: i32) -> (i32, i32) {
    %c0_i32 = arith.constant 0 : i32
    %c0_i32_0 = arith.constant 0 : i32
    return %arg0, %c0_i32 : i32, i32
  }
}

</mosaic_0001>

<llo_original>
// kernel: tpu_custom_call.1
$region0: #{tpu_custom_call.1}
  #allocation0 [shape = 'u32[]', space=smem, size = 0x4, offset = 0x4, fixed_abs, tag = 'smem constant byte address 0x4 - core index']
  #allocation1 [shape = 'u32[144,128]{1,0:T(1,128)}', space=vmem, size = 0x12000, scoped, tag = 'internal scratch']
  %s0 = inlined_call_operand.hbm [shape: s32[8,8], index: 0, kind: input, shape index: {}]
  %s1 = inlined_call_operand.hbm [shape: bf16[8,128], index: 1, kind: input, shape index: {}]
  %s2 = inlined_call_operand.vmem [shape: f32[1,128], index: 2, kind: input, shape index: {}]
  %s3 = inlined_call_operand.hbm [shape: bf16[128,128], index: 3, kind: input, shape index: {}]
  %s4 = inlined_call_operand.hbm [shape: bf16[128,128], index: 4, kind: input, shape index: {}]
  %s5 = inlined_call_operand.hbm [shape: bf16[128,128], index: 5, kind: input, shape index: {}]
  %s6 = inlined_call_operand.hbm [shape: f32[8,128], index: 6, kind: output, shape index: {}]
  %s7 = sld [smem:[#allocation0]]
  $region54: #{tpu_custom_call.1} parent=0
    _
  %s9 = ssub.s32 1, %s7
  %s10 = scalar_select 0, %s9, %s7
  $region1: #{tpu_custom_call.1} parent=0
    #allocation2 [shape = 'u8[4096]{0}', space=vmem, size = 0x1000, scoped, tag = 'input window, operand 0, single buffered']
    #allocation3 [shape = 's32[1]{0}', space=sflag, size = 0x4, scoped, tag = 'scoped memory for tpu_custom_call.1']
    #allocation4 [shape = 's32[1]{0}', space=sflag, size = 0x4, scoped, tag = 'scoped memory for tpu_custom_call.1']
    #allocation5 [shape = 'u8[2048]{0}', space=vmem, size = 0x800, scoped, tag = 'input window, operand 1, single buffered']
    #allocation6 [shape = 's32[1]{0}', space=sflag, size = 0x4, scoped, tag = 'scoped memory for tpu_custom_call.1']
    #allocation7 [shape = 'u8[32768]{0}', space=vmem, size = 0x8000, scoped, tag = 'input window, operand 3, single buffered']
    #allocation8 [shape = 'u8[32768]{0}', space=vmem, size = 0x8000, scoped, tag = 'input window, operand 4, single buffered']
    #allocation9 [shape = 's32[1]{0}', space=sflag, size = 0x4, scoped, tag = 'scoped memory for tpu_custom_call.1']
    #allocation10 [shape = 'u8[32768]{0}', space=vmem, size = 0x8000, scoped, tag = 'input window, operand 5, single buffered']
    #allocation11 [shape = 'u8[4096]{0}', space=vmem, size = 0x1000, scoped, tag = 'output window, operand 0, single buffered']
    %11 = vsyncpa [#allocation3], 0
    %12 = vsyncpa [#allocation6], 0
    %13 = vsyncpa [#allocation9], 0
    %14 = vsyncpa [#allocation4], 0
    // Predicated region
    $region2: #{tpu_custom_call.1} parent=1 // pred_check
      _
    $region3: #{tpu_custom_call.1} parent=1 // pred_check_branch
      %16 = sbr.rel (0) target = $region5
    $region4: #{tpu_custom_call.1} parent=1 // pred_region
      %s18 = ssub.s32 128, 128
      %19 = vsyncadd [#allocation3], %s18
      %s21 = sshll.u32 [#allocation2], 4
      %s22 = int_to_ptr.vmem [resolvable:$true] %s21
      %24 = dma.hbm_to_vmem [thread:$0]  %s0, 128, %s22, [#allocation3]
    $region5: #{tpu_custom_call.1} parent=1 // pred_fallthru
      _
    // Predicated region
    $region6: #{tpu_custom_call.1} parent=1 // pred_check
      _
    $region7: #{tpu_custom_call.1} parent=1 // pred_check_branch
      %26 = sbr.rel (0) target = $region9
    $region8: #{tpu_custom_call.1} parent=1 // pred_region
      %s28 = ssub.s32 64, 64
      %29 = vsyncadd [#allocation6], %s28
      %s31 = sshll.u32 [#allocation5], 4
      %s32 = int_to_ptr.vmem [resolvable:$true] %s31
      %34 = dma.hbm_to_vmem [thread:$0]  %s1, 64, %s32, [#allocation6]
    $region9: #{tpu_custom_call.1} parent=1 // pred_fallthru
      _
    // Predicated region
    $region10: #{tpu_custom_call.1} parent=1 // pred_check
      _
    $region11: #{tpu_custom_call.1} parent=1 // pred_check_branch
      %36 = sbr.rel (0) target = $region13
    $region12: #{tpu_custom_call.1} parent=1 // pred_region
      _
    $region13: #{tpu_custom_call.1} parent=1 // pred_fallthru
      _
    // Predicated region
    $region14: #{tpu_custom_call.1} parent=1 // pred_check
      _
    $region15: #{tpu_custom_call.1} parent=1 // pred_check_branch
      %38 = sbr.rel (0) target = $region17
    $region16: #{tpu_custom_call.1} parent=1 // pred_region
      %s40 = ssub.s32 1024, 1024
      %41 = vsyncadd [#allocation6], %s40
      %s42 = sshll.u32 [#allocation7], 4
      %s43 = int_to_ptr.vmem [resolvable:$true] %s42
      %48 = dma.hbm_to_vmem [thread:$0]  %s3, 1024, %s43, [#allocation6], 64, 64, 4
    $region17: #{tpu_custom_call.1} parent=1 // pred_fallthru
      _
    // Predicated region
    $region18: #{tpu_custom_call.1} parent=1 // pred_check
      _
    $region19: #{tpu_custom_call.1} parent=1 // pred_check_branch
      %50 = sbr.rel (0) target = $region21
    $region20: #{tpu_custom_call.1} parent=1 // pred_region
      %s52 = ssub.s32 1024, 1024
      %53 = vsyncadd [#allocation9], %s52
      %s54 = sshll.u32 [#allocation8], 4
      %s55 = int_to_ptr.vmem [resolvable:$true] %s54
      %60 = dma.hbm_to_vmem [thread:$0]  %s4, 1024, %s55, [#allocation9], 64, 64, 4
    $region21: #{tpu_custom_call.1} parent=1 // pred_fallthru
      _
    // Predicated region
    $region22: #{tpu_custom_call.1} parent=1 // pred_check
      _
    $region23: #{tpu_custom_call.1} parent=1 // pred_check_branch
      %62 = sbr.rel (0) target = $region25
    $region24: #{tpu_custom_call.1} parent=1 // pred_region
      %s64 = ssub.s32 1024, 1024
      %65 = vsyncadd [#allocation9], %s64
      %s66 = sshll.u32 [#allocation10], 4
      %s67 = int_to_ptr.vmem [resolvable:$true] %s66
      %72 = dma.hbm_to_vmem [thread:$0]  %s5, 1024, %s67, [#allocation9], 64, 64, 4
    $region25: #{tpu_custom_call.1} parent=1 // pred_fallthru
      _
    // Predicated region
    $region26: #{tpu_custom_call.1} parent=1 // pred_check
      _
    $region27: #{tpu_custom_call.1} parent=1 // pred_check_branch
      %74 = sbr.rel (0) target = $region29
    $region28: #{tpu_custom_call.1} parent=1 // pred_region
      %75 = dma.done [#allocation3], 128
    $region29: #{tpu_custom_call.1} parent=1 // pred_fallthru
      _
    // Predicated region
    $region30: #{tpu_custom_call.1} parent=1 // pred_check
      _
    $region31: #{tpu_custom_call.1} parent=1 // pred_check_branch
      %77 = sbr.rel (0) target = $region33
    $region32: #{tpu_custom_call.1} parent=1 // pred_region
      %78 = dma.done [#allocation6], 64
    $region33: #{tpu_custom_call.1} parent=1 // pred_fallthru
      _
    // Predicated region
    $region34: #{tpu_custom_call.1} parent=1 // pred_check
      _
    $region35: #{tpu_custom_call.1} parent=1 // pred_check_branch
      %80 = sbr.rel (0) target = $region37
    $region36: #{tpu_custom_call.1} parent=1 // pred_region
      %81 = dma.done [#allocation6], 1024
    $region37: #{tpu_custom_call.1} parent=1 // pred_fallthru
      _
    // Predicated region
    $region38: #{tpu_custom_call.1} parent=1 // pred_check
      _
    $region39: #{tpu_custom_call.1} parent=1 // pred_check_branch
      %83 = sbr.rel (0) target = $region41
    $region40: #{tpu_custom_call.1} parent=1 // pred_region
      %84 = dma.done [#allocation9], 1024
    $region41: #{tpu_custom_call.1} parent=1 // pred_fallthru
      _
    // Predicated region
    $region42: #{tpu_custom_call.1} parent=1 // pred_check
      _
    $region43: #{tpu_custom_call.1} parent=1 // pred_check_branch
      %86 = sbr.rel (0) target = $region45
    $region44: #{tpu_custom_call.1} parent=1 // pred_region
      %87 = dma.done [#allocation9], 1024
    $region45: #{tpu_custom_call.1} parent=1 // pred_fallthru
      _
    %v89 = vld [vmem:[#allocation2] sm:$0xff]
    %v90 = vcvt.s32.f32 %v89
    %v91 = vpack.c.bf16 %v90, %v90
    %v92 = vld [vmem:[#allocation5] sm:$0xf]
    %vm93 = vcmask 64512
    %v95 = vsel %vm93, %v91, 0
    %vm97 = vcmask 1043456
    %v99 = vsel %vm97, %v92, 0
    %101 = vmatprep.subr.bf16.mxu0 0
    %102 = vmatpush1.bf16.msra.mxu0 %v99
    %103 = vmatprep.subr.bf16.mxu0 0
    %104 = vmatpush1.bf16.msra.mxu0 0
    %105 = vmatprep.subr.bf16.mxu0 0
    %106 = vmatpush1.bf16.msra.mxu0 0
    %107 = vmatprep.subr.bf16.mxu0 0
    %108 = vmatpush1.bf16.msra.mxu0 0
    %109 = vmatprep.subr.bf16.mxu0 0
    %110 = vmatpush1.bf16.msra.mxu0 0
    %111 = vmatprep.subr.bf16.mxu0 0
    %112 = vmatpush1.bf16.msra.mxu0 0
    %113 = vmatprep.subr.bf16.mxu0 0
    %114 = vmatpush1.bf16.msra.mxu0 0
    %115 = vmatprep.subr.bf16.mxu0 0
    %116 = vmatpush1.bf16.msra.mxu0 0
    %117 = vmatprep.subr.bf16.mxu0 0
    %118 = vmatpush1.bf16.msra.mxu0 0
    %119 = vmatprep.subr.bf16.mxu0 0
    %120 = vmatpush1.bf16.msra.mxu0 0
    %121 = vmatprep.subr.bf16.mxu0 0
    %122 = vmatpush1.bf16.msra.mxu0 0
    %123 = vmatprep.subr.bf16.mxu0 0
    %124 = vmatpush1.bf16.msra.mxu0 0
    %125 = vmatprep.subr.bf16.mxu0 0
    %126 = vmatpush1.bf16.msra.mxu0 0
    %127 = vmatprep.subr.bf16.mxu0 0
    %128 = vmatpush1.bf16.msra.mxu0 0
    %129 = vmatprep.subr.bf16.mxu0 0
    %130 = vmatpush1.bf16.msra.mxu0 0
    %131 = vmatprep.subr.bf16.mxu0 0
    %132 = vmatpush1.bf16.msra.mxu0 0
    %133 = vmatprep.mubr.bf16.mxu0 0
    %134 = vmatmul.mubr.bf16.gmra.mrb[0].mxu0 %v95
    %v135 = vpop.f32.mrb[0].mxu0
    %v136 = vadd.f32 0.0, %v135
    %v137 = vpop.f32.mrb[0].mxu0
    %v138 = vpop.f32.mrb[0].mxu0
    %v139 = vpop.f32.mrb[0].mxu0
    %140 = vdwg.mxu0
    %v141 = vld [vmem:[%s2] sm:$0x1]
    %v143 = vlaneseq
    %v144 = vshrl.u32 %v143, 7
    %v145 = vsub.s32 0, %v144
    %v146 = vrot.slane %v141, %v145
    %vm148 = vcmp.eq.f32.partialorder %v136, %v146
    %v149 = vsel %vm148, 1, 0
    %v150 = vcvt.s32.f32 %v149
    %v151 = vpack.c.bf16 %v150, %v150
    %v152 = vld [vmem:[#allocation7] sm:$0xf]
    %v153 = vld [vmem:[#allocation7 + $0x4] sm:$0xf]
    %v154 = vld [vmem:[#allocation7 + $0x8] sm:$0xf]
    %v155 = vld [vmem:[#allocation7 + $0xc] sm:$0xf]
    %v156 = vld [vmem:[#allocation7 + $0x10] sm:$0xf]
    %v157 = vld [vmem:[#allocation7 + $0x14] sm:$0xf]
    %v158 = vld [vmem:[#allocation7 + $0x18] sm:$0xf]
    %v159 = vld [vmem:[#allocation7 + $0x1c] sm:$0xf]
    %v160 = vld [vmem:[#allocation7 + $0x20] sm:$0xf]
    %v161 = vld [vmem:[#allocation7 + $0x24] sm:$0xf]
    %v162 = vld [vmem:[#allocation7 + $0x28] sm:$0xf]
    %v163 = vld [vmem:[#allocation7 + $0x2c] sm:$0xf]
    %v164 = vld [vmem:[#allocation7 + $0x30] sm:$0xf]
    %v165 = vld [vmem:[#allocation7 + $0x34] sm:$0xf]
    %v166 = vld [vmem:[#allocation7 + $0x38] sm:$0xf]
    %v167 = vld [vmem:[#allocation7 + $0x3c] sm:$0xf]
    %v168 = vld [vmem:[#allocation8] sm:$0xf]
    %v169 = vld [vmem:[#allocation8 + $0x4] sm:$0xf]
    %v170 = vld [vmem:[#allocation8 + $0x8] sm:$0xf]
    %v171 = vld [vmem:[#allocation8 + $0xc] sm:$0xf]
    %v172 = vld [vmem:[#allocation8 + $0x10] sm:$0xf]
    %v173 = vld [vmem:[#allocation8 + $0x14] sm:$0xf]
    %v174 = vld [vmem:[#allocation8 + $0x18] sm:$0xf]
    %v175 = vld [vmem:[#allocation8 + $0x1c] sm:$0xf]
    %v176 = vld [vmem:[#allocation8 + $0x20] sm:$0xf]
    %v177 = vld [vmem:[#allocation8 + $0x24] sm:$0xf]
    %v178 = vld [vmem:[#allocation8 + $0x28] sm:$0xf]
    %v179 = vld [vmem:[#allocation8 + $0x2c] sm:$0xf]
    %v180 = vld [vmem:[#allocation8 + $0x30] sm:$0xf]
    %v181 = vld [vmem:[#allocation8 + $0x34] sm:$0xf]
    %v182 = vld [vmem:[#allocation8 + $0x38] sm:$0xf]
    %v183 = vld [vmem:[#allocation8 + $0x3c] sm:$0xf]
    %v200 = vunpack.c.l.b16 %v168
    %v201 = vunpack.c.l.b16 %v169
    %v202 = vunpack.c.l.b16 %v170
    %v203 = vunpack.c.l.b16 %v171
    %v204 = vunpack.c.l.b16 %v172
    %v205 = vunpack.c.l.b16 %v173
    %v206 = vunpack.c.l.b16 %v174
    %v207 = vunpack.c.l.b16 %v175
    %v208 = vunpack.c.l.b16 %v176
    %v209 = vunpack.c.l.b16 %v177
    %v210 = vunpack.c.l.b16 %v178
    %v211 = vunpack.c.l.b16 %v179
    %v212 = vunpack.c.l.b16 %v180
    %v213 = vunpack.c.l.b16 %v181
    %v214 = vunpack.c.l.b16 %v182
    %v215 = vunpack.c.l.b16 %v183
    %v216 = vpack.c.b16 %v201, %v200
    %v217 = vpack.c.b16 %v203, %v202
    %v218 = vpack.c.b16 %v205, %v204
    %v219 = vpack.c.b16 %v207, %v206
    %v220 = vpack.c.b16 %v209, %v208
    %v221 = vpack.c.b16 %v211, %v210
    %v222 = vpack.c.b16 %v213, %v212
    %v223 = vpack.c.b16 %v215, %v214
    %232 = vmatprep.subr.bf16.mxu0 0
    %233 = vmatpush1.bf16.msra.mxu0 %v216
    %234 = vmatprep.subr.bf16.mxu0 0
    %235 = vmatpush1.bf16.msra.mxu0 %v217
    %236 = vmatprep.subr.bf16.mxu0 0
    %237 = vmatpush1.bf16.msra.mxu0 %v218
    %238 = vmatprep.subr.bf16.mxu0 0
    %239 = vmatpush1.bf16.msra.mxu0 %v219
    %240 = vmatprep.subr.bf16.mxu0 0
    %241 = vmatpush1.bf16.msra.mxu0 %v220
    %242 = vmatprep.subr.bf16.mxu0 0
    %243 = vmatpush1.bf16.msra.mxu0 %v221
    %244 = vmatprep.subr.bf16.mxu0 0
    %245 = vmatpush1.bf16.msra.mxu0 %v222
    %246 = vmatprep.subr.bf16.mxu0 0
    %247 = vmatpush1.bf16.msra.mxu0 %v223
    %248 = vmatprep.subr.bf16.mxu0 0
    %249 = vmatpush1.bf16.msra.mxu0 0
    %250 = vmatprep.subr.bf16.mxu0 0
    %251 = vmatpush1.bf16.msra.mxu0 0
    %252 = vmatprep.subr.bf16.mxu0 0
    %253 = vmatpush1.bf16.msra.mxu0 0
    %254 = vmatprep.subr.bf16.mxu0 0
    %255 = vmatpush1.bf16.msra.mxu0 0
    %256 = vmatprep.subr.bf16.mxu0 0
    %257 = vmatpush1.bf16.msra.mxu0 0
    %258 = vmatprep.subr.bf16.mxu0 0
    %259 = vmatpush1.bf16.msra.mxu0 0
    %260 = vmatprep.subr.bf16.mxu0 0
    %261 = vmatpush1.bf16.msra.mxu0 0
    %262 = vmatprep.subr.bf16.mxu0 0
    %263 = vmatpush1.bf16.msra.mxu0 0
    %264 = vmatprep.mubr.bf16.mxu0 0
    %265 = vmatmul.mubr.bf16.gmra.mrb[0].mxu0 %v151
    %v266 = vpop.f32.mrb[0].mxu0
    %v267 = vadd.f32 0.0, %v266
    %v268 = vpop.f32.mrb[0].mxu0
    %v269 = vpop.f32.mrb[0].mxu0
    %v270 = vpop.f32.mrb[0].mxu0
    %271 = vdwg.mxu0
    %v288 = vunpack.c.l.b16 %v152
    %v289 = vunpack.c.l.b16 %v153
    %v290 = vunpack.c.l.b16 %v154
    %v291 = vunpack.c.l.b16 %v155
    %v292 = vunpack.c.l.b16 %v156
    %v293 = vunpack.c.l.b16 %v157
    %v294 = vunpack.c.l.b16 %v158
    %v295 = vunpack.c.l.b16 %v159
    %v296 = vunpack.c.l.b16 %v160
    %v297 = vunpack.c.l.b16 %v161
    %v298 = vunpack.c.l.b16 %v162
    %v299 = vunpack.c.l.b16 %v163
    %v300 = vunpack.c.l.b16 %v164
    %v301 = vunpack.c.l.b16 %v165
    %v302 = vunpack.c.l.b16 %v166
    %v303 = vunpack.c.l.b16 %v167
    %v304 = vpack.c.b16 %v289, %v288
    %v305 = vpack.c.b16 %v291, %v290
    %v306 = vpack.c.b16 %v293, %v292
    %v307 = vpack.c.b16 %v295, %v294
    %v308 = vpack.c.b16 %v297, %v296
    %v309 = vpack.c.b16 %v299, %v298
    %v310 = vpack.c.b16 %v301, %v300
    %v311 = vpack.c.b16 %v303, %v302
    %320 = vmatprep.subr.bf16.mxu0 0
    %321 = vmatpush1.bf16.msra.mxu0 %v304
    %322 = vmatprep.subr.bf16.mxu0 0
    %323 = vmatpush1.bf16.msra.mxu0 %v305
    %324 = vmatprep.subr.bf16.mxu0 0
    %325 = vmatpush1.bf16.msra.mxu0 %v306
    %326 = vmatprep.subr.bf16.mxu0 0
    %327 = vmatpush1.bf16.msra.mxu0 %v307
    %328 = vmatprep.subr.bf16.mxu0 0
    %329 = vmatpush1.bf16.msra.mxu0 %v308
    %330 = vmatprep.subr.bf16.mxu0 0
    %331 = vmatpush1.bf16.msra.mxu0 %v309
    %332 = vmatprep.subr.bf16.mxu0 0
    %333 = vmatpush1.bf16.msra.mxu0 %v310
    %334 = vmatprep.subr.bf16.mxu0 0
    %335 = vmatpush1.bf16.msra.mxu0 %v311
    %336 = vmatprep.subr.bf16.mxu0 0
    %337 = vmatpush1.bf16.msra.mxu0 0
    %338 = vmatprep.subr.bf16.mxu0 0
    %339 = vmatpush1.bf16.msra.mxu0 0
    %340 = vmatprep.subr.bf16.mxu0 0
    %341 = vmatpush1.bf16.msra.mxu0 0
    %342 = vmatprep.subr.bf16.mxu0 0
    %343 = vmatpush1.bf16.msra.mxu0 0
    %344 = vmatprep.subr.bf16.mxu0 0
    %345 = vmatpush1.bf16.msra.mxu0 0
    %346 = vmatprep.subr.bf16.mxu0 0
    %347 = vmatpush1.bf16.msra.mxu0 0
    %348 = vmatprep.subr.bf16.mxu0 0
    %349 = vmatpush1.bf16.msra.mxu0 0
    %350 = vmatprep.subr.bf16.mxu0 0
    %351 = vmatpush1.bf16.msra.mxu0 0
    %352 = vmatprep.mubr.bf16.mxu0 0
    %353 = vmatmul.mubr.bf16.gmra.mrb[0].mxu0 %v151
    %v354 = vpop.f32.mrb[0].mxu0
    %v355 = vadd.f32 %v267, %v354
    %v356 = vpop.f32.mrb[0].mxu0
    %v357 = vpop.f32.mrb[0].mxu0
    %v358 = vpop.f32.mrb[0].mxu0
    %359 = vdwg.mxu0
    %v360 = vld [vmem:[#allocation10] sm:$0xf]
    %v361 = vld [vmem:[#allocation10 + $0x4] sm:$0xf]
    %v362 = vld [vmem:[#allocation10 + $0x8] sm:$0xf]
    %v363 = vld [vmem:[#allocation10 + $0xc] sm:$0xf]
    %v364 = vld [vmem:[#allocation10 + $0x10] sm:$0xf]
    %v365 = vld [vmem:[#allocation10 + $0x14] sm:$0xf]
    %v366 = vld [vmem:[#allocation10 + $0x18] sm:$0xf]
    %v367 = vld [vmem:[#allocation10 + $0x1c] sm:$0xf]
    %v368 = vld [vmem:[#allocation10 + $0x20] sm:$0xf]
    %v369 = vld [vmem:[#allocation10 + $0x24] sm:$0xf]
    %v370 = vld [vmem:[#allocation10 + $0x28] sm:$0xf]
    %v371 = vld [vmem:[#allocation10 + $0x2c] sm:$0xf]
    %v372 = vld [vmem:[#allocation10 + $0x30] sm:$0xf]
    %v373 = vld [vmem:[#allocation10 + $0x34] sm:$0xf]
    %v374 = vld [vmem:[#allocation10 + $0x38] sm:$0xf]
    %v375 = vld [vmem:[#allocation10 + $0x3c] sm:$0xf]
    %v392 = vunpack.c.l.b16 %v360
    %v393 = vunpack.c.l.b16 %v361
    %v394 = vunpack.c.l.b16 %v362
    %v395 = vunpack.c.l.b16 %v363
    %v396 = vunpack.c.l.b16 %v364
    %v397 = vunpack.c.l.b16 %v365
    %v398 = vunpack.c.l.b16 %v366
    %v399 = vunpack.c.l.b16 %v367
    %v400 = vunpack.c.l.b16 %v368
    %v401 = vunpack.c.l.b16 %v369
    %v402 = vunpack.c.l.b16 %v370
    %v403 = vunpack.c.l.b16 %v371
    %v404 = vunpack.c.l.b16 %v372
    %v405 = vunpack.c.l.b16 %v373
    %v406 = vunpack.c.l.b16 %v374
    %v407 = vunpack.c.l.b16 %v375
    %v408 = vpack.c.b16 %v393, %v392
    %v409 = vpack.c.b16 %v395, %v394
    %v410 = vpack.c.b16 %v397, %v396
    %v411 = vpack.c.b16 %v399, %v398
    %v412 = vpack.c.b16 %v401, %v400
    %v413 = vpack.c.b16 %v403, %v402
    %v414 = vpack.c.b16 %v405, %v404
    %v415 = vpack.c.b16 %v407, %v406
    %424 = vmatprep.subr.bf16.mxu0 0
    %425 = vmatpush1.bf16.msra.mxu0 %v408
    %426 = vmatprep.subr.bf16.mxu0 0
    %427 = vmatpush1.bf16.msra.mxu0 %v409
    %428 = vmatprep.subr.bf16.mxu0 0
    %429 = vmatpush1.bf16.msra.mxu0 %v410
    %430 = vmatprep.subr.bf16.mxu0 0
    %431 = vmatpush1.bf16.msra.mxu0 %v411
    %432 = vmatprep.subr.bf16.mxu0 0
    %433 = vmatpush1.bf16.msra.mxu0 %v412
    %434 = vmatprep.subr.bf16.mxu0 0
    %435 = vmatpush1.bf16.msra.mxu0 %v413
    %436 = vmatprep.subr.bf16.mxu0 0
    %437 = vmatpush1.bf16.msra.mxu0 %v414
    %438 = vmatprep.subr.bf16.mxu0 0
    %439 = vmatpush1.bf16.msra.mxu0 %v415
    %440 = vmatprep.subr.bf16.mxu0 0
    %441 = vmatpush1.bf16.msra.mxu0 0
    %442 = vmatprep.subr.bf16.mxu0 0
    %443 = vmatpush1.bf16.msra.mxu0 0
    %444 = vmatprep.subr.bf16.mxu0 0
    %445 = vmatpush1.bf16.msra.mxu0 0
    %446 = vmatprep.subr.bf16.mxu0 0
    %447 = vmatpush1.bf16.msra.mxu0 0
    %448 = vmatprep.subr.bf16.mxu0 0
    %449 = vmatpush1.bf16.msra.mxu0 0
    %450 = vmatprep.subr.bf16.mxu0 0
    %451 = vmatpush1.bf16.msra.mxu0 0
    %452 = vmatprep.subr.bf16.mxu0 0
    %453 = vmatpush1.bf16.msra.mxu0 0
    %454 = vmatprep.subr.bf16.mxu0 0
    %455 = vmatpush1.bf16.msra.mxu0 0
    %456 = vmatprep.mubr.bf16.mxu0 0
    %457 = vmatmul.mubr.bf16.gmra.mrb[0].mxu0 %v151
    %v458 = vpop.f32.mrb[0].mxu0
    %v459 = vadd.f32 0.0, %v458
    %v460 = vpop.f32.mrb[0].mxu0
    %v461 = vpop.f32.mrb[0].mxu0
    %v462 = vpop.f32.mrb[0].mxu0
    %463 = vdwg.mxu0
    %v464 = vadd.f32 %v355, %v459
    %465 = vst [vmem:[#allocation11] sm:$0xff] %v464
    // Predicated region
    $region46: #{tpu_custom_call.1} parent=1 // pred_check
      _
    $region47: #{tpu_custom_call.1} parent=1 // pred_check_branch
      %467 = sbr.rel (0) target = $region49
    $region48: #{tpu_custom_call.1} parent=1 // pred_region
      %s469 = ssub.s32 128, 128
      %470 = vsyncadd [#allocation4], %s469
      %s472 = sshll.u32 [#allocation11], 4
      %s473 = int_to_ptr.vmem [resolvable:$true] %s472
      %475 = dma.vmem_to_hbm [thread:$0]  %s473, 128, %s6, [#allocation4]
    $region49: #{tpu_custom_call.1} parent=1 // pred_fallthru
      _
    // Predicated region
    $region50: #{tpu_custom_call.1} parent=1 // pred_check
      _
    $region51: #{tpu_custom_call.1} parent=1 // pred_check_branch
      %477 = sbr.rel (0) target = $region53
    $region52: #{tpu_custom_call.1} parent=1 // pred_region
      %478 = dma.done [#allocation4], 128
    $region53: #{tpu_custom_call.1} parent=1 // pred_fallthru
      _
    %479 = vsyncpa [#allocation3], 1
    %480 = vsyncpa [#allocation6], 1
    %481 = vsyncpa [#allocation9], 1
    %482 = vsyncpa [#allocation4], 1

</llo_original>
